<compile_context>
chip_gen: v7x
topology: tpu7x:2x2x1
jax: 0.10.0
libtpu: 0.0.40
codegen_flags: <defaults>
</compile_context>

<pallas_src>
import functools
import math

import jax
import jax.numpy as jnp
from jax import lax
from jax.experimental import pallas as pl
from jax.experimental.pallas import tpu as pltpu


def _conv_tanh_kmax_kernel(x_ref, w_ref, b_ref, o_ref, *, c_in, c_out, kh, h_out, k):
    """Fused Conv2dSame((kh,1)) + bias + tanh + k-max pooling along the field axis.

    x_ref : (TB, C_in, H_pad, E)   VMEM  (input already SAME-padded on the field axis)
    w_ref : (C_out*C_in*KH,)       SMEM  (flattened conv weights, f32)
    b_ref : (C_out,)               SMEM
    o_ref : (TB, C_out, K, E)      VMEM
    """
    x = x_ref[...].astype(jnp.float32)                      # (TB, C_in, H_pad, E)
    tb = x.shape[0]
    e = x.shape[-1]

    neg_inf = jnp.float32(-jnp.inf)
    big = jnp.float32(h_out)
    # field-position index, broadcast over (TB, H, E); float iota (int iota + cast)
    idx = lax.broadcasted_iota(jnp.int32, (tb, h_out, e), 1).astype(jnp.float32)

    for co in range(c_out):
        # ---- convolution along the field axis (kernel size over E is 1) ----
        acc = jnp.zeros((tb, h_out, e), dtype=jnp.float32)
        for ci in range(c_in):
            for dh in range(kh):
                w = w_ref[co * c_in * kh + ci * kh + dh]     # SMEM scalar
                acc = acc + w * x[:, ci, dh:dh + h_out, :]
        y = jnp.tanh(acc + b_ref[co])                        # (TB, H, E)

        # ---- k-max pooling along the field axis: values, sorted descending ----
        vals = y
        for j in range(k):
            cur = jnp.max(vals, axis=1, keepdims=True)       # (TB, 1, E)
            o_ref[:, co:co + 1, j:j + 1, :] = cur[:, None, :, :].astype(o_ref.dtype)
            # mask out the first position attaining the max (tie-safe, handles duplicates)
            sel = jnp.min(jnp.where(vals == cur, idx, big), axis=1, keepdims=True)
            vals = jnp.where(idx == sel, neg_inf, vals)


def _conv_tanh_kmax(x_padded, w, b, k, *, vmem_budget_bytes=8 * 1024 * 1024):
    """One CCPM stage. x_padded: (B, C_in, H_pad, E) f32, w: (C_out, C_in, KH), b: (C_out,)."""
    B, c_in, h_pad, e = x_padded.shape
    c_out, c_in_w, kh = w.shape
    assert c_in_w == c_in
    h_out = h_pad - (kh - 1)

    # Largest batch tile whose double-buffered in+out blocks fit a conservative VMEM budget.
    bytes_per_row = 4 * 2 * (c_in * h_pad * e + c_out * k * e)   # f32, double-buffered
    tb = max(1, min(B, vmem_budget_bytes // max(bytes_per_row, 1)))
    if B >= 2:
        tb = min(tb, (B + 1) // 2)          # keep >=2 grid steps so v7x megacore can shard
    while B % tb:                           # exact blocks (avoid ragged last block)
        tb -= 1

    kernel = functools.partial(
        _conv_tanh_kmax_kernel, c_in=c_in, c_out=c_out, kh=kh, h_out=h_out, k=k)

    return pl.pallas_call(
        kernel,
        out_shape=jax.ShapeDtypeStruct((B, c_out, k, e), jnp.float32),
        grid_spec=pltpu.PrefetchScalarGridSpec(
            num_scalar_prefetch=0,
            grid=(B // tb,),
            in_specs=[
                pl.BlockSpec((tb, c_in, h_pad, e), lambda bb: (bb, 0, 0, 0)),
                pl.BlockSpec(memory_space=pltpu.MemorySpace.SMEM),   # flattened weights
                pl.BlockSpec(memory_space=pltpu.MemorySpace.SMEM),   # bias
            ],
            out_specs=pl.BlockSpec((tb, c_out, k, e), lambda bb: (bb, 0, 0, 0)),
        ),
        compiler_params=pltpu.CompilerParams(
            dimension_semantics=("parallel",),
        ),
    )(x_padded, w.reshape(-1).astype(jnp.float32), b.astype(jnp.float32))


def conv_layer_forward(x, weights, biases, conv_kernel_width, conv_filters, field_size):
    """Pallas forward for ConvLayer. x: (B, 1, field_size, E) float32."""
    l = len(conv_filters)
    cur = x.astype(jnp.float32)
    if l == 0:
        return cur
    filed_shape = int(field_size)
    for i in range(1, l + 1):
        kh = int(conv_kernel_width[i - 1])
        w, b = weights[i - 1], biases[i - 1]
        if i < l:
            k = max(1, int((1 - pow(i / l, l - i)) * field_size))
        else:
            k = 3
        k = min(k, filed_shape)
        pad_h = kh - 1                                   # SAME pad, stride=1, dilation=1
        cur = jnp.pad(cur, ((0, 0), (0, 0), (pad_h // 2, pad_h - pad_h // 2), (0, 0)))
        cur = _conv_tanh_kmax(cur, w, b, k)
        filed_shape = k
    return cur


def conv_layer_ref(x, weights, biases, conv_kernel_width, conv_filters, field_size):
    """Pure-JAX reference reproducing the PyTorch forward."""
    l = len(conv_filters)
    cur = x.astype(jnp.float32)
    if l == 0:
        return cur
    filed_shape = int(field_size)
    for i in range(1, l + 1):
        w, b = weights[i - 1], biases[i - 1]
        kh = w.shape[-1]
        pad_h = kh - 1
        y = lax.conv_general_dilated(
            cur, w[..., None].astype(jnp.float32),
            window_strides=(1, 1),
            padding=((pad_h // 2, pad_h - pad_h // 2), (0, 0)),
            dimension_numbers=("NCHW", "OIHW", "NCHW"))
        y = jnp.tanh(y + b[None, :, None, None])
        if i < l:
            k = max(1, int((1 - pow(i / l, l - i)) * field_size))
        else:
            k = 3
        k = min(k, filed_shape)
        y = -jnp.sort(-y, axis=2)[:, :, :k, :]           # top-k values, descending
        filed_shape = k
        cur = y
    return cur


if __name__ == "__main__":
    # Small shapes: batch=4, field_size=8, embedding=16, two conv stages.
    B, field_size, E = 4, 8, 16
    conv_kernel_width = [3, 2]
    conv_filters = [2, 3]

    key = jax.random.PRNGKey(0)
    kx, kw1, kb1, kw2, kb2 = jax.random.split(key, 5)
    x = jax.random.normal(kx, (B, 1, field_size, E), dtype=jnp.float32)

    weights, biases = [], []
    in_ch = 1
    wkeys, bkeys = [kw1, kw2], [kb1, kb2]
    for i, out_ch in enumerate(conv_filters):
        kh = conv_kernel_width[i]
        limit = math.sqrt(6.0 / (in_ch * kh + out_ch * kh))          # xavier_uniform scale
        w = jax.random.uniform(wkeys[i], (out_ch, in_ch, kh),
                               minval=-limit, maxval=limit, dtype=jnp.float32)
        bias = jax.random.uniform(bkeys[i], (out_ch,),
                                  minval=-0.1, maxval=0.1, dtype=jnp.float32)
        weights.append(w)
        biases.append(bias)
        in_ch = out_ch

    out = conv_layer_forward(x, weights, biases, conv_kernel_width, conv_filters, field_size)
    out = jax.block_until_ready(out)

    ref = conv_layer_ref(x, weights, biases, conv_kernel_width, conv_filters, field_size)
    # layer1: k = min(4, 8) = 4 ; layer2: k = min(3, 4) = 3 -> (B, last_filters, 3, E)
    assert out.shape == (B, conv_filters[-1], 3, E), out.shape
    assert jnp.allclose(out, ref, atol=1e-5, rtol=1e-5), float(jnp.max(jnp.abs(out - ref)))

    print("KERNEL_OK")
</pallas_src>

<mosaic_0001>
module attributes {stable_mosaic.version = 11 : i64} {
  func.func @_conv_tanh_kmax_kernel(%arg0: i32, %arg1: memref<2x1x10x16xf32, #tpu.memory_space<vmem>>, %arg2: memref<6xf32, #tpu.memory_space<smem>>, %arg3: memref<2xf32, #tpu.memory_space<smem>>, %arg4: memref<2x2x4x16xf32, #tpu.memory_space<vmem>>) attributes {dimension_semantics = [#tpu.dimension_semantics<parallel>], iteration_bounds = array<i64: 2>, scalar_prefetch = 0 : i64, scratch_operands = 0 : i64, tpu.core_type = #tpu.core_type<tc>, window_params = [{transform_indices = @transform_0, window_bounds = array<i64: 2, 1, 10, 16>}, {transform_indices = @transform_1, window_bounds = array<i64: 6>}, {transform_indices = @transform_2, window_bounds = array<i64: 2>}, {transform_indices = @transform_3, window_bounds = array<i64: 2, 2, 4, 16>}]} {
    %c0 = arith.constant 0 : index
    %c0_0 = arith.constant 0 : index
    %c0_1 = arith.constant 0 : index
    %c0_2 = arith.constant 0 : index
    %0 = vector.load %arg1[%c0, %c0_0, %c0_1, %c0_2] : memref<2x1x10x16xf32, #tpu.memory_space<vmem>>, vector<2x1x10x16xf32>
    %1 = tpu.iota {dimensions = array<i32: 1>} : vector<2x8x16xi32>
    %2 = arith.sitofp %1 : vector<2x8x16xi32> to vector<2x8x16xf32>
    %cst = arith.constant 0.000000e+00 : f32
    %3 = vector.broadcast %cst : f32 to vector<2x8x16xf32>
    %c0_3 = arith.constant 0 : index
    %4 = memref.load %arg2[%c0_3] : memref<6xf32, #tpu.memory_space<smem>>
    %5 = vector.extract_strided_slice %0 {offsets = [0, 0, 0, 0], sizes = [2, 1, 8, 16], strides = [1, 1, 1, 1]} : vector<2x1x10x16xf32> to vector<2x1x8x16xf32>
    %6 = vector.shape_cast %5 : vector<2x1x8x16xf32> to vector<2x8x16xf32>
    %7 = vector.broadcast %4 : f32 to vector<2x8x16xf32>
    %8 = arith.mulf %7, %6 : vector<2x8x16xf32>
    %9 = arith.addf %3, %8 : vector<2x8x16xf32>
    %c1 = arith.constant 1 : index
    %10 = memref.load %arg2[%c1] : memref<6xf32, #tpu.memory_space<smem>>
    %11 = vector.extract_strided_slice %0 {offsets = [0, 0, 1, 0], sizes = [2, 1, 8, 16], strides = [1, 1, 1, 1]} : vector<2x1x10x16xf32> to vector<2x1x8x16xf32>
    %12 = vector.shape_cast %11 : vector<2x1x8x16xf32> to vector<2x8x16xf32>
    %13 = vector.broadcast %10 : f32 to vector<2x8x16xf32>
    %14 = arith.mulf %13, %12 : vector<2x8x16xf32>
    %15 = arith.addf %9, %14 : vector<2x8x16xf32>
    %c2 = arith.constant 2 : index
    %16 = memref.load %arg2[%c2] : memref<6xf32, #tpu.memory_space<smem>>
    %17 = vector.extract_strided_slice %0 {offsets = [0, 0, 2, 0], sizes = [2, 1, 8, 16], strides = [1, 1, 1, 1]} : vector<2x1x10x16xf32> to vector<2x1x8x16xf32>
    %18 = vector.shape_cast %17 : vector<2x1x8x16xf32> to vector<2x8x16xf32>
    %19 = vector.broadcast %16 : f32 to vector<2x8x16xf32>
    %20 = arith.mulf %19, %18 : vector<2x8x16xf32>
    %21 = arith.addf %15, %20 : vector<2x8x16xf32>
    %c0_4 = arith.constant 0 : index
    %22 = memref.load %arg3[%c0_4] : memref<2xf32, #tpu.memory_space<smem>>
    %23 = vector.broadcast %22 : f32 to vector<2x8x16xf32>
    %24 = arith.addf %21, %23 : vector<2x8x16xf32>
    %25 = math.tanh %24 : vector<2x8x16xf32>
    %cst_5 = arith.constant dense<0xFF800000> : vector<2x16xf32>
    %26 = vector.multi_reduction <maximumf>, %25, %cst_5 [1] : vector<2x8x16xf32> to vector<2x16xf32>
    %27 = vector.shape_cast %26 : vector<2x16xf32> to vector<2x1x16xf32>
    %28 = vector.shape_cast %27 : vector<2x1x16xf32> to vector<2x1x1x16xf32>
    %c0_6 = arith.constant 0 : index
    %c0_7 = arith.constant 0 : index
    %c0_8 = arith.constant 0 : index
    %c0_9 = arith.constant 0 : index
    %29 = vector.load %arg4[%c0_6, %c0_7, %c0_8, %c0_9] : memref<2x2x4x16xf32, #tpu.memory_space<vmem>>, vector<2x1x1x16xf32>
    tpu.vector_store %arg4[%c0_6, %c0_7, %c0_8, %c0_9], %28 {strides = array<i32>} : memref<2x2x4x16xf32, #tpu.memory_space<vmem>>, vector<2x1x1x16xf32>,
    %30 = vector.broadcast %27 : vector<2x1x16xf32> to vector<2x8x16xf32>
    %31 = arith.cmpf oeq, %25, %30 : vector<2x8x16xf32>
    %cst_10 = arith.constant 8.000000e+00 : f32
    %32 = vector.broadcast %cst_10 : f32 to vector<2x8x16xf32>
    %33 = arith.select %31, %2, %32 : vector<2x8x16xi1>, vector<2x8x16xf32>
    %cst_11 = arith.constant dense<0x7F800000> : vector<2x16xf32>
    %34 = vector.multi_reduction <minimumf>, %33, %cst_11 [1] : vector<2x8x16xf32> to vector<2x16xf32>
    %35 = vector.shape_cast %34 : vector<2x16xf32> to vector<2x1x16xf32>
    %36 = vector.broadcast %35 : vector<2x1x16xf32> to vector<2x8x16xf32>
    %37 = arith.cmpf oeq, %2, %36 : vector<2x8x16xf32>
    %cst_12 = arith.constant 0xFF800000 : f32
    %38 = vector.broadcast %cst_12 : f32 to vector<2x8x16xf32>
    %39 = arith.select %37, %38, %25 : vector<2x8x16xi1>, vector<2x8x16xf32>
    %cst_13 = arith.constant dense<0xFF800000> : vector<2x16xf32>
    %40 = vector.multi_reduction <maximumf>, %39, %cst_13 [1] : vector<2x8x16xf32> to vector<2x16xf32>
    %41 = vector.shape_cast %40 : vector<2x16xf32> to vector<2x1x16xf32>
    %42 = vector.shape_cast %41 : vector<2x1x16xf32> to vector<2x1x1x16xf32>
    %c0_14 = arith.constant 0 : index
    %c0_15 = arith.constant 0 : index
    %c1_16 = arith.constant 1 : index
    %c0_17 = arith.constant 0 : index
    %43 = vector.load %arg4[%c0_14, %c0_15, %c1_16, %c0_17] : memref<2x2x4x16xf32, #tpu.memory_space<vmem>>, vector<2x1x1x16xf32>
    tpu.vector_store %arg4[%c0_14, %c0_15, %c1_16, %c0_17], %42 {strides = array<i32>} : memref<2x2x4x16xf32, #tpu.memory_space<vmem>>, vector<2x1x1x16xf32>,
    %44 = vector.broadcast %41 : vector<2x1x16xf32> to vector<2x8x16xf32>
    %45 = arith.cmpf oeq, %39, %44 : vector<2x8x16xf32>
    %cst_18 = arith.constant 8.000000e+00 : f32
    %46 = vector.broadcast %cst_18 : f32 to vector<2x8x16xf32>
    %47 = arith.select %45, %2, %46 : vector<2x8x16xi1>, vector<2x8x16xf32>
    %cst_19 = arith.constant dense<0x7F800000> : vector<2x16xf32>
    %48 = vector.multi_reduction <minimumf>, %47, %cst_19 [1] : vector<2x8x16xf32> to vector<2x16xf32>
    %49 = vector.shape_cast %48 : vector<2x16xf32> to vector<2x1x16xf32>
    %50 = vector.broadcast %49 : vector<2x1x16xf32> to vector<2x8x16xf32>
    %51 = arith.cmpf oeq, %2, %50 : vector<2x8x16xf32>
    %cst_20 = arith.constant 0xFF800000 : f32
    %52 = vector.broadcast %cst_20 : f32 to vector<2x8x16xf32>
    %53 = arith.select %51, %52, %39 : vector<2x8x16xi1>, vector<2x8x16xf32>
    %cst_21 = arith.constant dense<0xFF800000> : vector<2x16xf32>
    %54 = vector.multi_reduction <maximumf>, %53, %cst_21 [1] : vector<2x8x16xf32> to vector<2x16xf32>
    %55 = vector.shape_cast %54 : vector<2x16xf32> to vector<2x1x16xf32>
    %56 = vector.shape_cast %55 : vector<2x1x16xf32> to vector<2x1x1x16xf32>
    %c0_22 = arith.constant 0 : index
    %c0_23 = arith.constant 0 : index
    %c2_24 = arith.constant 2 : index
    %c0_25 = arith.constant 0 : index
    %57 = vector.load %arg4[%c0_22, %c0_23, %c2_24, %c0_25] : memref<2x2x4x16xf32, #tpu.memory_space<vmem>>, vector<2x1x1x16xf32>
    tpu.vector_store %arg4[%c0_22, %c0_23, %c2_24, %c0_25], %56 {strides = array<i32>} : memref<2x2x4x16xf32, #tpu.memory_space<vmem>>, vector<2x1x1x16xf32>,
    %58 = vector.broadcast %55 : vector<2x1x16xf32> to vector<2x8x16xf32>
    %59 = arith.cmpf oeq, %53, %58 : vector<2x8x16xf32>
    %cst_26 = arith.constant 8.000000e+00 : f32
    %60 = vector.broadcast %cst_26 : f32 to vector<2x8x16xf32>
    %61 = arith.select %59, %2, %60 : vector<2x8x16xi1>, vector<2x8x16xf32>
    %cst_27 = arith.constant dense<0x7F800000> : vector<2x16xf32>
    %62 = vector.multi_reduction <minimumf>, %61, %cst_27 [1] : vector<2x8x16xf32> to vector<2x16xf32>
    %63 = vector.shape_cast %62 : vector<2x16xf32> to vector<2x1x16xf32>
    %64 = vector.broadcast %63 : vector<2x1x16xf32> to vector<2x8x16xf32>
    %65 = arith.cmpf oeq, %2, %64 : vector<2x8x16xf32>
    %cst_28 = arith.constant 0xFF800000 : f32
    %66 = vector.broadcast %cst_28 : f32 to vector<2x8x16xf32>
    %67 = arith.select %65, %66, %53 : vector<2x8x16xi1>, vector<2x8x16xf32>
    %cst_29 = arith.constant dense<0xFF800000> : vector<2x16xf32>
    %68 = vector.multi_reduction <maximumf>, %67, %cst_29 [1] : vector<2x8x16xf32> to vector<2x16xf32>
    %69 = vector.shape_cast %68 : vector<2x16xf32> to vector<2x1x16xf32>
    %70 = vector.shape_cast %69 : vector<2x1x16xf32> to vector<2x1x1x16xf32>
    %c0_30 = arith.constant 0 : index
    %c0_31 = arith.constant 0 : index
    %c3 = arith.constant 3 : index
    %c0_32 = arith.constant 0 : index
    %71 = vector.load %arg4[%c0_30, %c0_31, %c3, %c0_32] : memref<2x2x4x16xf32, #tpu.memory_space<vmem>>, vector<2x1x1x16xf32>
    tpu.vector_store %arg4[%c0_30, %c0_31, %c3, %c0_32], %70 {strides = array<i32>} : memref<2x2x4x16xf32, #tpu.memory_space<vmem>>, vector<2x1x1x16xf32>,
    %cst_33 = arith.constant 0.000000e+00 : f32
    %72 = vector.broadcast %cst_33 : f32 to vector<2x8x16xf32>
    %c3_34 = arith.constant 3 : index
    %73 = memref.load %arg2[%c3_34] : memref<6xf32, #tpu.memory_space<smem>>
    %74 = vector.extract_strided_slice %0 {offsets = [0, 0, 0, 0], sizes = [2, 1, 8, 16], strides = [1, 1, 1, 1]} : vector<2x1x10x16xf32> to vector<2x1x8x16xf32>
    %75 = vector.shape_cast %74 : vector<2x1x8x16xf32> to vector<2x8x16xf32>
    %76 = vector.broadcast %73 : f32 to vector<2x8x16xf32>
    %77 = arith.mulf %76, %75 : vector<2x8x16xf32>
    %78 = arith.addf %72, %77 : vector<2x8x16xf32>
    %c4 = arith.constant 4 : index
    %79 = memref.load %arg2[%c4] : memref<6xf32, #tpu.memory_space<smem>>
    %80 = vector.extract_strided_slice %0 {offsets = [0, 0, 1, 0], sizes = [2, 1, 8, 16], strides = [1, 1, 1, 1]} : vector<2x1x10x16xf32> to vector<2x1x8x16xf32>
    %81 = vector.shape_cast %80 : vector<2x1x8x16xf32> to vector<2x8x16xf32>
    %82 = vector.broadcast %79 : f32 to vector<2x8x16xf32>
    %83 = arith.mulf %82, %81 : vector<2x8x16xf32>
    %84 = arith.addf %78, %83 : vector<2x8x16xf32>
    %c5 = arith.constant 5 : index
    %85 = memref.load %arg2[%c5] : memref<6xf32, #tpu.memory_space<smem>>
    %86 = vector.extract_strided_slice %0 {offsets = [0, 0, 2, 0], sizes = [2, 1, 8, 16], strides = [1, 1, 1, 1]} : vector<2x1x10x16xf32> to vector<2x1x8x16xf32>
    %87 = vector.shape_cast %86 : vector<2x1x8x16xf32> to vector<2x8x16xf32>
    %88 = vector.broadcast %85 : f32 to vector<2x8x16xf32>
    %89 = arith.mulf %88, %87 : vector<2x8x16xf32>
    %90 = arith.addf %84, %89 : vector<2x8x16xf32>
    %c1_35 = arith.constant 1 : index
    %91 = memref.load %arg3[%c1_35] : memref<2xf32, #tpu.memory_space<smem>>
    %92 = vector.broadcast %91 : f32 to vector<2x8x16xf32>
    %93 = arith.addf %90, %92 : vector<2x8x16xf32>
    %94 = math.tanh %93 : vector<2x8x16xf32>
    %cst_36 = arith.constant dense<0xFF800000> : vector<2x16xf32>
    %95 = vector.multi_reduction <maximumf>, %94, %cst_36 [1] : vector<2x8x16xf32> to vector<2x16xf32>
    %96 = vector.shape_cast %95 : vector<2x16xf32> to vector<2x1x16xf32>
    %97 = vector.shape_cast %96 : vector<2x1x16xf32> to vector<2x1x1x16xf32>
    %c0_37 = arith.constant 0 : index
    %c1_38 = arith.constant 1 : index
    %c0_39 = arith.constant 0 : index
    %c0_40 = arith.constant 0 : index
    %98 = vector.load %arg4[%c0_37, %c1_38, %c0_39, %c0_40] : memref<2x2x4x16xf32, #tpu.memory_space<vmem>>, vector<2x1x1x16xf32>
    tpu.vector_store %arg4[%c0_37, %c1_38, %c0_39, %c0_40], %97 {strides = array<i32>} : memref<2x2x4x16xf32, #tpu.memory_space<vmem>>, vector<2x1x1x16xf32>,
    %99 = vector.broadcast %96 : vector<2x1x16xf32> to vector<2x8x16xf32>
    %100 = arith.cmpf oeq, %94, %99 : vector<2x8x16xf32>
    %cst_41 = arith.constant 8.000000e+00 : f32
    %101 = vector.broadcast %cst_41 : f32 to vector<2x8x16xf32>
    %102 = arith.select %100, %2, %101 : vector<2x8x16xi1>, vector<2x8x16xf32>
    %cst_42 = arith.constant dense<0x7F800000> : vector<2x16xf32>
    %103 = vector.multi_reduction <minimumf>, %102, %cst_42 [1] : vector<2x8x16xf32> to vector<2x16xf32>
    %104 = vector.shape_cast %103 : vector<2x16xf32> to vector<2x1x16xf32>
    %105 = vector.broadcast %104 : vector<2x1x16xf32> to vector<2x8x16xf32>
    %106 = arith.cmpf oeq, %2, %105 : vector<2x8x16xf32>
    %cst_43 = arith.constant 0xFF800000 : f32
    %107 = vector.broadcast %cst_43 : f32 to vector<2x8x16xf32>
    %108 = arith.select %106, %107, %94 : vector<2x8x16xi1>, vector<2x8x16xf32>
    %cst_44 = arith.constant dense<0xFF800000> : vector<2x16xf32>
    %109 = vector.multi_reduction <maximumf>, %108, %cst_44 [1] : vector<2x8x16xf32> to vector<2x16xf32>
    %110 = vector.shape_cast %109 : vector<2x16xf32> to vector<2x1x16xf32>
    %111 = vector.shape_cast %110 : vector<2x1x16xf32> to vector<2x1x1x16xf32>
    %c0_45 = arith.constant 0 : index
    %c1_46 = arith.constant 1 : index
    %c1_47 = arith.constant 1 : index
    %c0_48 = arith.constant 0 : index
    %112 = vector.load %arg4[%c0_45, %c1_46, %c1_47, %c0_48] : memref<2x2x4x16xf32, #tpu.memory_space<vmem>>, vector<2x1x1x16xf32>
    tpu.vector_store %arg4[%c0_45, %c1_46, %c1_47, %c0_48], %111 {strides = array<i32>} : memref<2x2x4x16xf32, #tpu.memory_space<vmem>>, vector<2x1x1x16xf32>,
    %113 = vector.broadcast %110 : vector<2x1x16xf32> to vector<2x8x16xf32>
    %114 = arith.cmpf oeq, %108, %113 : vector<2x8x16xf32>
    %cst_49 = arith.constant 8.000000e+00 : f32
    %115 = vector.broadcast %cst_49 : f32 to vector<2x8x16xf32>
    %116 = arith.select %114, %2, %115 : vector<2x8x16xi1>, vector<2x8x16xf32>
    %cst_50 = arith.constant dense<0x7F800000> : vector<2x16xf32>
    %117 = vector.multi_reduction <minimumf>, %116, %cst_50 [1] : vector<2x8x16xf32> to vector<2x16xf32>
    %118 = vector.shape_cast %117 : vector<2x16xf32> to vector<2x1x16xf32>
    %119 = vector.broadcast %118 : vector<2x1x16xf32> to vector<2x8x16xf32>
    %120 = arith.cmpf oeq, %2, %119 : vector<2x8x16xf32>
    %cst_51 = arith.constant 0xFF800000 : f32
    %121 = vector.broadcast %cst_51 : f32 to vector<2x8x16xf32>
    %122 = arith.select %120, %121, %108 : vector<2x8x16xi1>, vector<2x8x16xf32>
    %cst_52 = arith.constant dense<0xFF800000> : vector<2x16xf32>
    %123 = vector.multi_reduction <maximumf>, %122, %cst_52 [1] : vector<2x8x16xf32> to vector<2x16xf32>
    %124 = vector.shape_cast %123 : vector<2x16xf32> to vector<2x1x16xf32>
    %125 = vector.shape_cast %124 : vector<2x1x16xf32> to vector<2x1x1x16xf32>
    %c0_53 = arith.constant 0 : index
    %c1_54 = arith.constant 1 : index
    %c2_55 = arith.constant 2 : index
    %c0_56 = arith.constant 0 : index
    %126 = vector.load %arg4[%c0_53, %c1_54, %c2_55, %c0_56] : memref<2x2x4x16xf32, #tpu.memory_space<vmem>>, vector<2x1x1x16xf32>
    tpu.vector_store %arg4[%c0_53, %c1_54, %c2_55, %c0_56], %125 {strides = array<i32>} : memref<2x2x4x16xf32, #tpu.memory_space<vmem>>, vector<2x1x1x16xf32>,
    %127 = vector.broadcast %124 : vector<2x1x16xf32> to vector<2x8x16xf32>
    %128 = arith.cmpf oeq, %122, %127 : vector<2x8x16xf32>
    %cst_57 = arith.constant 8.000000e+00 : f32
    %129 = vector.broadcast %cst_57 : f32 to vector<2x8x16xf32>
    %130 = arith.select %128, %2, %129 : vector<2x8x16xi1>, vector<2x8x16xf32>
    %cst_58 = arith.constant dense<0x7F800000> : vector<2x16xf32>
    %131 = vector.multi_reduction <minimumf>, %130, %cst_58 [1] : vector<2x8x16xf32> to vector<2x16xf32>
    %132 = vector.shape_cast %131 : vector<2x16xf32> to vector<2x1x16xf32>
    %133 = vector.broadcast %132 : vector<2x1x16xf32> to vector<2x8x16xf32>
    %134 = arith.cmpf oeq, %2, %133 : vector<2x8x16xf32>
    %cst_59 = arith.constant 0xFF800000 : f32
    %135 = vector.broadcast %cst_59 : f32 to vector<2x8x16xf32>
    %136 = arith.select %134, %135, %122 : vector<2x8x16xi1>, vector<2x8x16xf32>
    %cst_60 = arith.constant dense<0xFF800000> : vector<2x16xf32>
    %137 = vector.multi_reduction <maximumf>, %136, %cst_60 [1] : vector<2x8x16xf32> to vector<2x16xf32>
    %138 = vector.shape_cast %137 : vector<2x16xf32> to vector<2x1x16xf32>
    %139 = vector.shape_cast %138 : vector<2x1x16xf32> to vector<2x1x1x16xf32>
    %c0_61 = arith.constant 0 : index
    %c1_62 = arith.constant 1 : index
    %c3_63 = arith.constant 3 : index
    %c0_64 = arith.constant 0 : index
    %140 = vector.load %arg4[%c0_61, %c1_62, %c3_63, %c0_64] : memref<2x2x4x16xf32, #tpu.memory_space<vmem>>, vector<2x1x1x16xf32>
    tpu.vector_store %arg4[%c0_61, %c1_62, %c3_63, %c0_64], %139 {strides = array<i32>} : memref<2x2x4x16xf32, #tpu.memory_space<vmem>>, vector<2x1x1x16xf32>,
    return
  }
  func.func @transform_0(%arg0: i32) -> (i32, i32, i32, i32) {
    %c0_i32 = arith.constant 0 : i32
    %c0_i32_0 = arith.constant 0 : i32
    %c0_i32_1 = arith.constant 0 : i32
    %c0_i32_2 = arith.constant 0 : i32
    return %arg0, %c0_i32, %c0_i32_0, %c0_i32_1 : i32, i32, i32, i32
  }
  func.func @transform_1(%arg0: i32) -> i32 {
    %c0_i32 = arith.constant 0 : i32
    %c0_i32_0 = arith.constant 0 : i32
    return %c0_i32 : i32
  }
  func.func @transform_2(%arg0: i32) -> i32 {
    %c0_i32 = arith.constant 0 : i32
    %c0_i32_0 = arith.constant 0 : i32
    return %c0_i32 : i32
  }
  func.func @transform_3(%arg0: i32) -> (i32, i32, i32, i32) {
    %c0_i32 = arith.constant 0 : i32
    %c0_i32_0 = arith.constant 0 : i32
    %c0_i32_1 = arith.constant 0 : i32
    %c0_i32_2 = arith.constant 0 : i32
    return %arg0, %c0_i32, %c0_i32_0, %c0_i32_1 : i32, i32, i32, i32
  }
}

</mosaic_0001>

<llo_original>
// kernel: tpu_custom_call.1
$region0: #{tpu_custom_call.1}
  #allocation0 [shape = 'u32[]', space=smem, size = 0x4, offset = 0x4, fixed_abs, tag = 'smem constant byte address 0x4 - core index']
  #allocation1 [shape = 'u32[144,128]{1,0:T(1,128)}', space=vmem, size = 0x12000, scoped, tag = 'internal scratch']
  %s0 = inlined_call_operand.vmem [shape: f32[4,1,10,16], index: 0, kind: input, shape index: {}]
  %s1 = inlined_call_operand.vmem [shape: f32[6], index: 1, kind: input, shape index: {}]
  %s2 = inlined_call_operand.vmem [shape: f32[2], index: 2, kind: input, shape index: {}]
  %s3 = inlined_call_operand.hbm [shape: f32[4,2,4,16], index: 3, kind: output, shape index: {}]
  %s4 = sld [smem:[#allocation0]]
  $region53: #{tpu_custom_call.1} parent=0
    _
  %s6 = ssub.s32 1, %s4
  %s7 = scalar_select 0, %s6, %s4
  $region1: #{tpu_custom_call.1} parent=0
    #allocation2 [shape = 'u8[512]{0}', space=smem, size = 0x200, scoped, tag = 'input window, operand 1, single buffered']
    #allocation3 [shape = 's32[2]{0}', space=sflag, size = 0x8, scoped, tag = 'scoped memory for tpu_custom_call.1']
    #allocation4 [shape = 's32[2]{0}', space=sflag, size = 0x8, scoped, tag = 'scoped memory for tpu_custom_call.1']
    #allocation5 [shape = 'u8[512]{0}', space=smem, size = 0x200, scoped, tag = 'input window, operand 2, single buffered']
    #allocation6 [shape = 's32[1]{0}', space=sflag, size = 0x4, scoped, tag = 'scoped memory for tpu_custom_call.1']
    #allocation7 [shape = 'u8[16384]{0}', space=vmem, size = 0x4000, scoped, tag = 'output window, operand 0']
    %8 = vsyncpa [#allocation4], 0
    %9 = vsyncpa [#allocation6], 0
    %10 = vsyncpa [#allocation3], 0
    %s11 = scalar_lea.sflag [#allocation3], 1
    %12 = vsyncpa %s11, 0
    loop: start=0, step=1, limit=4
    $region2: #{tpu_custom_call.1} parent=1 // loop_pre_header
      _
    $region3: #{tpu_custom_call.1} parent=1 // loop_header
      %s14 = sphi 0, %s18
      %p15 = scmp.ge.s32.totalorder %s14, 4
      %s24 = sphi 0, %s26
      %s27 = sphi 0, %s24
      %s28 = sphi 0, %s27
      %s44 = sphi 0, %s28
      %s48 = sphi 0, %s48
      %s50 = sphi 0, %s48
      %s51 = sphi 0, %s50
      %s65 = sphi 0, %s51
      %s69 = sphi 0, %s69
      %s71 = sphi 0, %s69
      %s72 = sphi 0, %s71
      %s86 = sphi 0, %s72
      %s92 = sphi 0, %s94
      %s95 = sphi 0, %s92
      %s96 = sphi 0, %s95
      %s112 = sphi 0, %s96
    $region4: #{tpu_custom_call.1} parent=1 // loop_header_branch
      %17 = sbr.rel (%p15) target = $region8
    $region5: #{tpu_custom_call.1} parent=1 // loop_body
      %s19 = ssub.s32 %s14, 1
      %s20 = ssub.s32 %s14, 2
      %s21 = sadd.s32 %s14, 1
      %s22 = ssub.s32 %s14, %s21
      %p23 = scmp.eq.s32.totalorder %s22, 0
      %s25 = sadd.s32 %s24, 1
      %s26 = scalar_select %p23, %s24, %s25
      %p29 = pneg %p23
      %p30 = scmp.eq.s32.totalorder %s14, 1
      %p31 = por %p29, %p30
      %p32 = scmp.ne.s32.totalorder %s24, %s27
      %p33 = scmp.eq.s32.totalorder %s14, 0
      %p34 = por %p32, %p33
      %p35 = scmp.ne.s32.totalorder %s24, %s27
      %p36 = scmp.eq.s32.totalorder %s19, 1
      %p37 = por %p35, %p36
      %p38 = scmp.ne.s32.totalorder %s27, %s28
      %p39 = scmp.eq.s32.totalorder %s19, 0
      %p40 = por %p38, %p39
      %p41 = scmp.ne.s32.totalorder %s27, %s28
      %p42 = scmp.eq.s32.totalorder %s20, 1
      %p43 = por %p41, %p42
      %p45 = scmp.ne.s32.totalorder %s28, %s44
      %p46 = scmp.eq.s32.totalorder %s20, 0
      %p47 = por %p45, %p46
      %s49 = sadd.s32 %s48, 1
      %p52 = scmp.eq.s32.totalorder %s14, 1
      %p53 = scmp.ne.s32.totalorder %s48, %s50
      %p54 = scmp.eq.s32.totalorder %s14, 0
      %p55 = por %p53, %p54
      %p56 = scmp.ne.s32.totalorder %s48, %s50
      %p57 = scmp.eq.s32.totalorder %s19, 1
      %p58 = por %p56, %p57
      %p59 = scmp.ne.s32.totalorder %s50, %s51
      %p60 = scmp.eq.s32.totalorder %s19, 0
      %p61 = por %p59, %p60
      %p62 = scmp.ne.s32.totalorder %s50, %s51
      %p63 = scmp.eq.s32.totalorder %s20, 1
      %p64 = por %p62, %p63
      %p66 = scmp.ne.s32.totalorder %s51, %s65
      %p67 = scmp.eq.s32.totalorder %s20, 0
      %p68 = por %p66, %p67
      %s70 = sadd.s32 %s69, 1
      %p73 = scmp.eq.s32.totalorder %s14, 1
      %p74 = scmp.ne.s32.totalorder %s69, %s71
      %p75 = scmp.eq.s32.totalorder %s14, 0
      %p76 = por %p74, %p75
      %p77 = scmp.ne.s32.totalorder %s69, %s71
      %p78 = scmp.eq.s32.totalorder %s19, 1
      %p79 = por %p77, %p78
      %p80 = scmp.ne.s32.totalorder %s71, %s72
      %p81 = scmp.eq.s32.totalorder %s19, 0
      %p82 = por %p80, %p81
      %p83 = scmp.ne.s32.totalorder %s71, %s72
      %p84 = scmp.eq.s32.totalorder %s20, 1
      %p85 = por %p83, %p84
      %p87 = scmp.ne.s32.totalorder %s72, %s86
      %p88 = scmp.eq.s32.totalorder %s20, 0
      %p89 = por %p87, %p88
      %s90 = ssub.s32 %s14, %s21
      %p91 = scmp.eq.s32.totalorder %s90, 0
      %s93 = sadd.s32 %s92, 1
      %s94 = scalar_select %p91, %s92, %s93
      %p97 = pneg %p91
      %p98 = scmp.eq.s32.totalorder %s14, 1
      %p99 = por %p97, %p98
      %p100 = scmp.ne.s32.totalorder %s92, %s95
      %p101 = scmp.eq.s32.totalorder %s14, 0
      %p102 = por %p100, %p101
      %p103 = scmp.ne.s32.totalorder %s92, %s95
      %p104 = scmp.eq.s32.totalorder %s19, 1
      %p105 = por %p103, %p104
      %p106 = scmp.ne.s32.totalorder %s95, %s96
      %p107 = scmp.eq.s32.totalorder %s19, 0
      %p108 = por %p106, %p107
      %p109 = scmp.ne.s32.totalorder %s95, %s96
      %p110 = scmp.eq.s32.totalorder %s20, 1
      %p111 = por %p109, %p110
      %p113 = scmp.ne.s32.totalorder %s96, %s112
      %p114 = scmp.eq.s32.totalorder %s20, 0
      %p115 = por %p113, %p114
      %p116 = scmp.le.s32.totalorder 1, %s14
      %p117 = scmp.lt.s32.totalorder %s14, 3
      %p118 = pnand %p116, %p117
      %p119 = pneg %p118
      // Predicated region
      $region9: #{tpu_custom_call.1} parent=5 // pred_check
        _
      $region10: #{tpu_custom_call.1} parent=5 // pred_check_branch
        %121 = sbr.rel (%p118) target = $region12
      $region11: #{tpu_custom_call.1} parent=5 // pred_region
        %s122 = ssub.s32 %s14, 1
        // Predicated region
        $region13: #{tpu_custom_call.1} parent=11 // pred_check
          %p123 = pneg %p61
        $region14: #{tpu_custom_call.1} parent=11 // pred_check_branch
          %125 = sbr.rel (%p123) target = $region16
        $region15: #{tpu_custom_call.1} parent=11 // pred_region
          %s127 = ssub.s32 16, 16
          %128 = vsyncadd [#allocation4], %s127
          %s130 = sshll.u32 %s1, 4
          %s131 = int_to_ptr.vmem [resolvable:$true] %s130
          %133 = dma.vmem_to_smem %s131, 16, [#allocation2], [#allocation4]
        $region16: #{tpu_custom_call.1} parent=11 // pred_fallthru
          _
        // Predicated region
        $region17: #{tpu_custom_call.1} parent=11 // pred_check
          %p134 = pneg %p82
        $region18: #{tpu_custom_call.1} parent=11 // pred_check_branch
          %136 = sbr.rel (%p134) target = $region20
        $region19: #{tpu_custom_call.1} parent=11 // pred_region
          %s138 = ssub.s32 16, 16
          %139 = vsyncadd [#allocation6], %s138
          %s141 = sshll.u32 %s2, 4
          %s142 = int_to_ptr.vmem [resolvable:$true] %s141
          %144 = dma.vmem_to_smem %s142, 16, [#allocation5], [#allocation6]
        $region20: #{tpu_custom_call.1} parent=11 // pred_fallthru
          _
      $region12: #{tpu_custom_call.1} parent=5 // pred_fallthru
        _
      %p145 = scmp.lt.s32.totalorder %s14, 2
      // Predicated region
      $region21: #{tpu_custom_call.1} parent=5 // pred_check
        %p146 = pneg %p145
      $region22: #{tpu_custom_call.1} parent=5 // pred_check_branch
        %148 = sbr.rel (%p146) target = $region24
      $region23: #{tpu_custom_call.1} parent=5 // pred_region
        // Predicated region
        $region25: #{tpu_custom_call.1} parent=23 // pred_check
          %p149 = pneg %p34
        $region26: #{tpu_custom_call.1} parent=23 // pred_check_branch
          %151 = sbr.rel (%p149) target = $region28
        $region27: #{tpu_custom_call.1} parent=23 // pred_region
          %s152 = smul.u32 2, %s14
          %p153 = scmp.lt.s32.totalorder %s152, 3
          %s154 = scalar_select %p153, %s152, 3
          %s155 = smul.addr %s154, 2
          %s156 = smul.addr %s155, 8
          %s157 = scalar_lea.vmem %s0, %s156
          %s158 = smul.u32 2, %s14
        $region28: #{tpu_custom_call.1} parent=23 // pred_fallthru
          _
      $region24: #{tpu_custom_call.1} parent=5 // pred_fallthru
        _
      %p159 = scmp.le.s32.totalorder 1, %s14
      %p160 = scmp.lt.s32.totalorder %s14, 3
      %p161 = pnand %p159, %p160
      %p162 = pneg %p161
      // Predicated region
      $region29: #{tpu_custom_call.1} parent=5 // pred_check
        _
      $region30: #{tpu_custom_call.1} parent=5 // pred_check_branch
        %164 = sbr.rel (%p161) target = $region32
      $region31: #{tpu_custom_call.1} parent=5 // pred_region
        %s165 = ssub.s32 %s14, 1
        // Predicated region
        $region33: #{tpu_custom_call.1} parent=31 // pred_check
          %p166 = pneg %p61
        $region34: #{tpu_custom_call.1} parent=31 // pred_check_branch
          %168 = sbr.rel (%p166) target = $region36
        $region35: #{tpu_custom_call.1} parent=31 // pred_region
          %169 = dma.done [#allocation4], 16
        $region36: #{tpu_custom_call.1} parent=31 // pred_fallthru
          _
        // Predicated region
        $region37: #{tpu_custom_call.1} parent=31 // pred_check
          %p170 = pneg %p82
        $region38: #{tpu_custom_call.1} parent=31 // pred_check_branch
          %172 = sbr.rel (%p170) target = $region40
        $region39: #{tpu_custom_call.1} parent=31 // pred_region
          %173 = dma.done [#allocation6], 16
        $region40: #{tpu_custom_call.1} parent=31 // pred_fallthru
          _
        %174 = sfence
        %s175 = smul.u32 2, %s19
        %p176 = scmp.lt.s32.totalorder %s175, 3
        %s177 = scalar_select %p176, %s175, 3
        %s178 = smul.addr %s177, 2
        %s179 = smul.addr %s178, 8
        %s180 = scalar_lea.vmem %s0, %s179
        %p181 = pneg %p40
        %p182 = pneg %p37
        %p183 = pneg %p61
        %p184 = pneg %p58
        %p185 = pneg %p82
        %p186 = pneg %p79
        %p187 = pneg %p108
        %p188 = pneg %p105
        %s189 = sand.u32 %s95, 1
        %s190 = scalar_lea.sflag [#allocation3], %s189
        %s191 = sand.u32 %s95, 1
        %s192 = smul.addr %s191, 16
        %s193 = scalar_lea.vmem [#allocation7], %s192
        %s194 = smul.u32 2, %s19
        %p195 = scmp.lt.s32.totalorder %s194, 3
        %s196 = scalar_select %p195, %s194, 3
        %s197 = smul.addr %s196, 2
        %s198 = smul.addr %s197, 8
        %s199 = scalar_lea.vmem %s0, %s198
        %s200 = smul.u32 2, %s19
        %s201 = smul.u32 2, %s19
        %v202 = vld [vmem:[%s199] sm:$0xff]
        %v203 = vld [vmem:[%s199 + $0x8] sm:$0x3]
        %v204 = vld [vmem:[%s199 + $0x10] sm:$0xff]
        %v205 = vld [vmem:[%s199 + $0x18] sm:$0x3]
        %v206 = vlaneseq
        %v207 = vshrl.u32 %v206, 7
        %v208 = vcvt.s32.f32 %v207
        %s209 = sld [smem:[#allocation2]]
        %v210 = vstv %s209
        %v211 = vmul.f32 %v210, %v202
        %v212 = vmul.f32 %v210, %v204
        %v213 = vadd.f32 %v211, 0.0
        %v214 = vadd.f32 %v212, 0.0
        %s215 = sld [smem:[#allocation2 + $0x1]]
        %v216 = vstv %s215
        %v217 = vmul.f32 %v216, %v202
        %v218 = vmul.f32 %v216, %v203
        %v219 = vmul.f32 %v216, %v204
        %v220 = vmul.f32 %v216, %v205
        %vm225 = vcmask 1046528
        %v226 = vrot.slane %v217, 1
        %v227 = vrot.slane %v218, 1
        %v228 = vsel %vm225, %v226, %v227
        %v229 = vrot.slane %v219, 1
        %v230 = vrot.slane %v220, 1
        %v231 = vsel %vm225, %v229, %v230
        %v234 = vadd.f32 %v213, %v228
        %v235 = vadd.f32 %v214, %v231
        %s236 = sld [smem:[#allocation2 + $0x2]]
        %v237 = vstv %s236
        %v238 = vmul.f32 %v237, %v202
        %v239 = vmul.f32 %v237, %v203
        %v240 = vmul.f32 %v237, %v204
        %v241 = vmul.f32 %v237, %v205
        %vm246 = vcmask 1045504
        %v247 = vrot.slane %v238, 2
        %v248 = vrot.slane %v239, 2
        %v249 = vsel %vm246, %v247, %v248
        %v250 = vrot.slane %v240, 2
        %v251 = vrot.slane %v241, 2
        %v252 = vsel %vm246, %v250, %v251
        %v255 = vadd.f32 %v234, %v249
        %v256 = vadd.f32 %v235, %v252
        %s257 = sld [smem:[#allocation5]]
        %v258 = vstv %s257
        %v259 = vadd.f32 %v255, %v258
        %v260 = vadd.f32 %v256, %v258
        %v261 = vtanh.pop %v259
        %v262 = vtanh.pop %v260
        %vm263 = vcmask 130048
        %v264 = vsel %vm263, %v261, -inf
        %v265 = vrot.slane %v264, 4
        %v266 = vmax.f32 %v264, %v265
        %v267 = vrot.slane %v266, 2
        %v268 = vmax.f32 %v266, %v267
        %v269 = vrot.slane %v268, 1
        %v270 = vmax.f32 %v268, %v269
        %v271 = vsel %vm263, %v262, -inf
        %v272 = vrot.slane %v271, 4
        %v273 = vmax.f32 %v271, %v272
        %v274 = vrot.slane %v273, 2
        %v275 = vmax.f32 %v273, %v274
        %v276 = vrot.slane %v275, 1
        %v277 = vmax.f32 %v275, %v276
        %vm278 = vcmask 122880
        %279 = vst.msk [vmem:[%s193] sm:$0x1] %vm278, %v270
        %280 = vst.msk [vmem:[%s193 + $0x8] sm:$0x1] %vm278, %v277
        %vm281 = vcmp.eq.f32.partialorder %v261, %v270
        %vm282 = vcmp.eq.f32.partialorder %v262, %v277
        %v283 = vsel %vm281, %v208, 8.0
        %v284 = vsel %vm282, %v208, 8.0
        %v285 = vsel %vm263, %v283, inf
        %v286 = vrot.slane %v285, 4
        %v287 = vmin.f32 %v285, %v286
        %v288 = vrot.slane %v287, 2
        %v289 = vmin.f32 %v287, %v288
        %v290 = vrot.slane %v289, 1
        %v291 = vmin.f32 %v289, %v290
        %v292 = vsel %vm263, %v284, inf
        %v293 = vrot.slane %v292, 4
        %v294 = vmin.f32 %v292, %v293
        %v295 = vrot.slane %v294, 2
        %v296 = vmin.f32 %v294, %v295
        %v297 = vrot.slane %v296, 1
        %v298 = vmin.f32 %v296, %v297
        %vm299 = vcmp.eq.f32.partialorder %v208, %v291
        %vm300 = vcmp.eq.f32.partialorder %v208, %v298
        %v301 = vsel %vm299, -inf, %v261
        %v302 = vsel %vm300, -inf, %v262
        %v303 = vsel %vm263, %v301, -inf
        %v304 = vrot.slane %v303, 4
        %v305 = vmax.f32 %v303, %v304
        %v306 = vrot.slane %v305, 2
        %v307 = vmax.f32 %v305, %v306
        %v308 = vrot.slane %v307, 1
        %v309 = vmax.f32 %v307, %v308
        %v310 = vsel %vm263, %v302, -inf
        %v311 = vrot.slane %v310, 4
        %v312 = vmax.f32 %v310, %v311
        %v313 = vrot.slane %v312, 2
        %v314 = vmax.f32 %v312, %v313
        %v315 = vrot.slane %v314, 1
        %v316 = vmax.f32 %v314, %v315
        %317 = vst.msk [vmem:[%s193 + $0x1] sm:$0x1] %vm278, %v309
        %318 = vst.msk [vmem:[%s193 + $0x9] sm:$0x1] %vm278, %v316
        %vm319 = vcmp.eq.f32.partialorder %v301, %v309
        %vm320 = vcmp.eq.f32.partialorder %v302, %v316
        %v321 = vsel %vm319, %v208, 8.0
        %v322 = vsel %vm320, %v208, 8.0
        %v323 = vsel %vm263, %v321, inf
        %v324 = vrot.slane %v323, 4
        %v325 = vmin.f32 %v323, %v324
        %v326 = vrot.slane %v325, 2
        %v327 = vmin.f32 %v325, %v326
        %v328 = vrot.slane %v327, 1
        %v329 = vmin.f32 %v327, %v328
        %v330 = vsel %vm263, %v322, inf
        %v331 = vrot.slane %v330, 4
        %v332 = vmin.f32 %v330, %v331
        %v333 = vrot.slane %v332, 2
        %v334 = vmin.f32 %v332, %v333
        %v335 = vrot.slane %v334, 1
        %v336 = vmin.f32 %v334, %v335
        %vm337 = vcmp.eq.f32.partialorder %v208, %v329
        %vm338 = vcmp.eq.f32.partialorder %v208, %v336
        %v339 = vsel %vm337, -inf, %v301
        %v340 = vsel %vm338, -inf, %v302
        %v341 = vsel %vm263, %v339, -inf
        %v342 = vrot.slane %v341, 4
        %v343 = vmax.f32 %v341, %v342
        %v344 = vrot.slane %v343, 2
        %v345 = vmax.f32 %v343, %v344
        %v346 = vrot.slane %v345, 1
        %v347 = vmax.f32 %v345, %v346
        %v348 = vsel %vm263, %v340, -inf
        %v349 = vrot.slane %v348, 4
        %v350 = vmax.f32 %v348, %v349
        %v351 = vrot.slane %v350, 2
        %v352 = vmax.f32 %v350, %v351
        %v353 = vrot.slane %v352, 1
        %v354 = vmax.f32 %v352, %v353
        %355 = vst.msk [vmem:[%s193 + $0x2] sm:$0x1] %vm278, %v347
        %356 = vst.msk [vmem:[%s193 + $0xa] sm:$0x1] %vm278, %v354
        %vm357 = vcmp.eq.f32.partialorder %v339, %v347
        %vm358 = vcmp.eq.f32.partialorder %v340, %v354
        %v359 = vsel %vm357, %v208, 8.0
        %v360 = vsel %vm358, %v208, 8.0
        %v361 = vsel %vm263, %v359, inf
        %v362 = vrot.slane %v361, 4
        %v363 = vmin.f32 %v361, %v362
        %v364 = vrot.slane %v363, 2
        %v365 = vmin.f32 %v363, %v364
        %v366 = vrot.slane %v365, 1
        %v367 = vmin.f32 %v365, %v366
        %v368 = vsel %vm263, %v360, inf
        %v369 = vrot.slane %v368, 4
        %v370 = vmin.f32 %v368, %v369
        %v371 = vrot.slane %v370, 2
        %v372 = vmin.f32 %v370, %v371
        %v373 = vrot.slane %v372, 1
        %v374 = vmin.f32 %v372, %v373
        %vm375 = vcmp.eq.f32.partialorder %v208, %v367
        %vm376 = vcmp.eq.f32.partialorder %v208, %v374
        %v377 = vsel %vm375, -inf, %v339
        %v378 = vsel %vm376, -inf, %v340
        %v379 = vsel %vm263, %v377, -inf
        %v380 = vrot.slane %v379, 4
        %v381 = vmax.f32 %v379, %v380
        %v382 = vrot.slane %v381, 2
        %v383 = vmax.f32 %v381, %v382
        %v384 = vrot.slane %v383, 1
        %v385 = vmax.f32 %v383, %v384
        %v386 = vsel %vm263, %v378, -inf
        %v387 = vrot.slane %v386, 4
        %v388 = vmax.f32 %v386, %v387
        %v389 = vrot.slane %v388, 2
        %v390 = vmax.f32 %v388, %v389
        %v391 = vrot.slane %v390, 1
        %v392 = vmax.f32 %v390, %v391
        %393 = vst.msk [vmem:[%s193 + $0x3] sm:$0x1] %vm278, %v385
        %394 = vst.msk [vmem:[%s193 + $0xb] sm:$0x1] %vm278, %v392
        %s395 = sld [smem:[#allocation2 + $0x3]]
        %v396 = vstv %s395
        %v397 = vmul.f32 %v396, %v202
        %v398 = vmul.f32 %v396, %v204
        %v399 = vadd.f32 %v397, 0.0
        %v400 = vadd.f32 %v398, 0.0
        %s401 = sld [smem:[#allocation2 + $0x4]]
        %v402 = vstv %s401
        %v403 = vmul.f32 %v402, %v202
        %v404 = vmul.f32 %v402, %v203
        %v405 = vmul.f32 %v402, %v204
        %v406 = vmul.f32 %v402, %v205
        %v411 = vrot.slane %v403, 1
        %v412 = vrot.slane %v404, 1
        %v413 = vsel %vm225, %v411, %v412
        %v414 = vrot.slane %v405, 1
        %v415 = vrot.slane %v406, 1
        %v416 = vsel %vm225, %v414, %v415
        %v419 = vadd.f32 %v399, %v413
        %v420 = vadd.f32 %v400, %v416
        %s421 = sld [smem:[#allocation2 + $0x5]]
        %v422 = vstv %s421
        %v423 = vmul.f32 %v422, %v202
        %v424 = vmul.f32 %v422, %v203
        %v425 = vmul.f32 %v422, %v204
        %v426 = vmul.f32 %v422, %v205
        %v431 = vrot.slane %v423, 2
        %v432 = vrot.slane %v424, 2
        %v433 = vsel %vm246, %v431, %v432
        %v434 = vrot.slane %v425, 2
        %v435 = vrot.slane %v426, 2
        %v436 = vsel %vm246, %v434, %v435
        %v439 = vadd.f32 %v419, %v433
        %v440 = vadd.f32 %v420, %v436
        %s441 = sld [smem:[#allocation5 + $0x1]]
        %v442 = vstv %s441
        %v443 = vadd.f32 %v439, %v442
        %v444 = vadd.f32 %v440, %v442
        %v445 = vtanh.pop %v443
        %v446 = vtanh.pop %v444
        %v447 = vsel %vm263, %v445, -inf
        %v448 = vrot.slane %v447, 4
        %v449 = vmax.f32 %v447, %v448
        %v450 = vrot.slane %v449, 2
        %v451 = vmax.f32 %v449, %v450
        %v452 = vrot.slane %v451, 1
        %v453 = vmax.f32 %v451, %v452
        %v454 = vsel %vm263, %v446, -inf
        %v455 = vrot.slane %v454, 4
        %v456 = vmax.f32 %v454, %v455
        %v457 = vrot.slane %v456, 2
        %v458 = vmax.f32 %v456, %v457
        %v459 = vrot.slane %v458, 1
        %v460 = vmax.f32 %v458, %v459
        %s461 = scalar_lea.vmem %s193, 4 [#allocation7]
        %462 = vst.msk [vmem:[%s461] sm:$0x1] %vm278, %v453
        %463 = vst.msk [vmem:[%s461 + $0x8] sm:$0x1] %vm278, %v460
        %vm464 = vcmp.eq.f32.partialorder %v445, %v453
        %vm465 = vcmp.eq.f32.partialorder %v446, %v460
        %v466 = vsel %vm464, %v208, 8.0
        %v467 = vsel %vm465, %v208, 8.0
        %v468 = vsel %vm263, %v466, inf
        %v469 = vrot.slane %v468, 4
        %v470 = vmin.f32 %v468, %v469
        %v471 = vrot.slane %v470, 2
        %v472 = vmin.f32 %v470, %v471
        %v473 = vrot.slane %v472, 1
        %v474 = vmin.f32 %v472, %v473
        %v475 = vsel %vm263, %v467, inf
        %v476 = vrot.slane %v475, 4
        %v477 = vmin.f32 %v475, %v476
        %v478 = vrot.slane %v477, 2
        %v479 = vmin.f32 %v477, %v478
        %v480 = vrot.slane %v479, 1
        %v481 = vmin.f32 %v479, %v480
        %vm482 = vcmp.eq.f32.partialorder %v208, %v474
        %vm483 = vcmp.eq.f32.partialorder %v208, %v481
        %v484 = vsel %vm482, -inf, %v445
        %v485 = vsel %vm483, -inf, %v446
        %v486 = vsel %vm263, %v484, -inf
        %v487 = vrot.slane %v486, 4
        %v488 = vmax.f32 %v486, %v487
        %v489 = vrot.slane %v488, 2
        %v490 = vmax.f32 %v488, %v489
        %v491 = vrot.slane %v490, 1
        %v492 = vmax.f32 %v490, %v491
        %v493 = vsel %vm263, %v485, -inf
        %v494 = vrot.slane %v493, 4
        %v495 = vmax.f32 %v493, %v494
        %v496 = vrot.slane %v495, 2
        %v497 = vmax.f32 %v495, %v496
        %v498 = vrot.slane %v497, 1
        %v499 = vmax.f32 %v497, %v498
        %500 = vst.msk [vmem:[%s461 + $0x1] sm:$0x1] %vm278, %v492
        %501 = vst.msk [vmem:[%s461 + $0x9] sm:$0x1] %vm278, %v499
        %vm502 = vcmp.eq.f32.partialorder %v484, %v492
        %vm503 = vcmp.eq.f32.partialorder %v485, %v499
        %v504 = vsel %vm502, %v208, 8.0
        %v505 = vsel %vm503, %v208, 8.0
        %v506 = vsel %vm263, %v504, inf
        %v507 = vrot.slane %v506, 4
        %v508 = vmin.f32 %v506, %v507
        %v509 = vrot.slane %v508, 2
        %v510 = vmin.f32 %v508, %v509
        %v511 = vrot.slane %v510, 1
        %v512 = vmin.f32 %v510, %v511
        %v513 = vsel %vm263, %v505, inf
        %v514 = vrot.slane %v513, 4
        %v515 = vmin.f32 %v513, %v514
        %v516 = vrot.slane %v515, 2
        %v517 = vmin.f32 %v515, %v516
        %v518 = vrot.slane %v517, 1
        %v519 = vmin.f32 %v517, %v518
        %vm520 = vcmp.eq.f32.partialorder %v208, %v512
        %vm521 = vcmp.eq.f32.partialorder %v208, %v519
        %v522 = vsel %vm520, -inf, %v484
        %v523 = vsel %vm521, -inf, %v485
        %v524 = vsel %vm263, %v522, -inf
        %v525 = vrot.slane %v524, 4
        %v526 = vmax.f32 %v524, %v525
        %v527 = vrot.slane %v526, 2
        %v528 = vmax.f32 %v526, %v527
        %v529 = vrot.slane %v528, 1
        %v530 = vmax.f32 %v528, %v529
        %v531 = vsel %vm263, %v523, -inf
        %v532 = vrot.slane %v531, 4
        %v533 = vmax.f32 %v531, %v532
        %v534 = vrot.slane %v533, 2
        %v535 = vmax.f32 %v533, %v534
        %v536 = vrot.slane %v535, 1
        %v537 = vmax.f32 %v535, %v536
        %538 = vst.msk [vmem:[%s461 + $0x2] sm:$0x1] %vm278, %v530
        %539 = vst.msk [vmem:[%s461 + $0xa] sm:$0x1] %vm278, %v537
        %vm540 = vcmp.eq.f32.partialorder %v522, %v530
        %vm541 = vcmp.eq.f32.partialorder %v523, %v537
        %v542 = vsel %vm540, %v208, 8.0
        %v543 = vsel %vm541, %v208, 8.0
        %v544 = vsel %vm263, %v542, inf
        %v545 = vrot.slane %v544, 4
        %v546 = vmin.f32 %v544, %v545
        %v547 = vrot.slane %v546, 2
        %v548 = vmin.f32 %v546, %v547
        %v549 = vrot.slane %v548, 1
        %v550 = vmin.f32 %v548, %v549
        %v551 = vsel %vm263, %v543, inf
        %v552 = vrot.slane %v551, 4
        %v553 = vmin.f32 %v551, %v552
        %v554 = vrot.slane %v553, 2
        %v555 = vmin.f32 %v553, %v554
        %v556 = vrot.slane %v555, 1
        %v557 = vmin.f32 %v555, %v556
        %vm558 = vcmp.eq.f32.partialorder %v208, %v550
        %vm559 = vcmp.eq.f32.partialorder %v208, %v557
        %v560 = vsel %vm558, -inf, %v522
        %v561 = vsel %vm559, -inf, %v523
        %v562 = vsel %vm263, %v560, -inf
        %v563 = vrot.slane %v562, 4
        %v564 = vmax.f32 %v562, %v563
        %v565 = vrot.slane %v564, 2
        %v566 = vmax.f32 %v564, %v565
        %v567 = vrot.slane %v566, 1
        %v568 = vmax.f32 %v566, %v567
        %v569 = vsel %vm263, %v561, -inf
        %v570 = vrot.slane %v569, 4
        %v571 = vmax.f32 %v569, %v570
        %v572 = vrot.slane %v571, 2
        %v573 = vmax.f32 %v571, %v572
        %v574 = vrot.slane %v573, 1
        %v575 = vmax.f32 %v573, %v574
        %576 = vst.msk [vmem:[%s461 + $0x3] sm:$0x1] %vm278, %v568
        %577 = vst.msk [vmem:[%s461 + $0xb] sm:$0x1] %vm278, %v575
        %s578 = sand.u32 %s95, 1
        %s579 = scalar_lea.sflag [#allocation3], %s578
        %s580 = sand.u32 %s95, 1
        %s581 = smul.addr %s580, 16
        %s582 = scalar_lea.vmem [#allocation7], %s581
        // Predicated region
        $region41: #{tpu_custom_call.1} parent=31 // pred_check
          %p583 = pneg %p105
        $region42: #{tpu_custom_call.1} parent=31 // pred_check_branch
          %585 = sbr.rel (%p583) target = $region44
        $region43: #{tpu_custom_call.1} parent=31 // pred_region
          %s586 = smul.u32 2, %s19
          %s588 = ssub.s32 256, 256
          %589 = vsyncadd %s579, %s588
          %s590 = smul.addr %s586, 2
          %s591 = smul.addr %s590, 64
          %s592 = scalar_lea.hbm %s3, %s591
          %s593 = sshll.u32 %s582, 4
          %s594 = int_to_ptr.vmem [resolvable:$true] %s593
          %599 = dma.vmem_to_hbm [thread:$0]  %s594, 256, %s592, %s579, 64, 64, 4
        $region44: #{tpu_custom_call.1} parent=31 // pred_fallthru
          _
      $region32: #{tpu_custom_call.1} parent=5 // pred_fallthru
        _
      %p600 = scmp.le.s32.totalorder 2, %s14
      // Predicated region
      $region45: #{tpu_custom_call.1} parent=5 // pred_check
        %p601 = pneg %p600
      $region46: #{tpu_custom_call.1} parent=5 // pred_check_branch
        %603 = sbr.rel (%p601) target = $region48
      $region47: #{tpu_custom_call.1} parent=5 // pred_region
        %s604 = ssub.s32 %s14, 2
        // Predicated region
        $region49: #{tpu_custom_call.1} parent=47 // pred_check
          %p605 = pneg %p111
        $region50: #{tpu_custom_call.1} parent=47 // pred_check_branch
          %607 = sbr.rel (%p605) target = $region52
        $region51: #{tpu_custom_call.1} parent=47 // pred_region
          %s608 = sand.u32 %s96, 1
          %s609 = scalar_lea.sflag [#allocation3], %s608
          %s610 = sand.u32 %s96, 1
          %s611 = smul.addr %s610, 16
          %s612 = scalar_lea.vmem [#allocation7], %s611
          %613 = dma.done %s609, 256
        $region52: #{tpu_custom_call.1} parent=47 // pred_fallthru
          _
      $region48: #{tpu_custom_call.1} parent=5 // pred_fallthru
        _
    $region6: #{tpu_custom_call.1} parent=1 // loop_footer
      %s18 = sadd.s32 1, %s14
    $region7: #{tpu_custom_call.1} parent=1 // loop_footer_branch
      %13 = sbr.rel target = $region3
    $region8: #{tpu_custom_call.1} parent=1 // loop_exit
      _
    %614 = vsyncpa [#allocation3], 1
    %s615 = scalar_lea.sflag [#allocation3], 1
    %616 = vsyncpa %s615, 1
    %617 = vsyncpa [#allocation4], 1
    %s618 = scalar_lea.sflag [#allocation4], 1
    %619 = vsyncpa %s618, 1
    %620 = vsyncpa [#allocation6], 1

</llo_original>
